<compile_context>
chip_gen: v7x
topology: tpu7x:2x2x1
jax: 0.10.0
libtpu: 0.0.40
codegen_flags: <defaults>
</compile_context>

<pallas_src>
import functools

import jax
import jax.numpy as jnp
import numpy as np
from jax import lax
from jax.experimental import pallas as pl
from jax.experimental.pallas import tpu as pltpu


def _tap_masks(H, W):
    """(9, H*W) f32: 1.0 where tap k reads a real pixel, 0.0 where it reads zero-padding."""
    ys, xs = np.meshgrid(np.arange(H), np.arange(W), indexing="ij")
    ys = ys.reshape(-1)
    xs = xs.reshape(-1)
    masks = np.zeros((9, H * W), np.float32)
    for k in range(9):
        ry, rx = k // 3 - 1, k % 3 - 1
        valid = (ys + ry >= 0) & (ys + ry < H) & (xs + rx >= 0) & (xs + rx < W)
        masks[k] = valid.astype(np.float32)
    return jnp.asarray(masks)


def _resblock_kernel(x_ref, w1_ref, w2_ref, mask_ref, o_ref, *, H, W):
    # x_ref:    (1, C, H*W)  one batch element; channels on sublanes, flat spatial on lanes
    # w1_ref:   (9*C, C)     conv1 weights; row k*C + co holds w1[co, :, dy, dx], k = dy*3 + dx
    # w2_ref:   (9*C, C)     conv2 weights, same layout
    # mask_ref: (9, H*W)     per-tap zero-padding masks (f32), grid-invariant
    # o_ref:    (1, C, H*W)
    C = o_ref.shape[1]
    HW = H * W
    cdt = w1_ref.dtype                       # MXU operand dtype (f32, or bf16 on v6e/v7x)

    x = x_ref[0]                             # (C, HW), input dtype
    masks = mask_ref[...]                    # (9, HW), f32

    def conv3x3(w_ref, img):
        # img: (C, HW) in MXU dtype.  Single MXU issue: channel-mix for all 9 taps at once.
        v = jnp.dot(w_ref[...], img, preferred_element_type=jnp.float32)   # (9*C, HW) f32
        acc = v[4 * C:5 * C, :]              # center tap (dy=dx=1): no shift, no mask
        for k in range(9):
            if k == 4:
                continue
            ry, rx = k // 3 - 1, k % 3 - 1
            # out[p] needs src[p + ry*W + rx]  ==  jnp.roll(src, -(ry*W + rx))[p]
            shift = (-(ry * W + rx)) % HW
            vk = pltpu.roll(v[k * C:(k + 1) * C, :], shift, 1)              # XLU lane rotate
            acc = acc + vk * masks[k:k + 1, :]                              # zero the padded border
        return acc                           # (C, HW) f32

    h = jnp.maximum(conv3x3(w1_ref, x.astype(cdt)), 0.0)      # conv1 + ReLU, stays in vregs
    y = conv3x3(w2_ref, h.astype(cdt))                        # conv2
    o_ref[0] = (y + x.astype(jnp.float32)).astype(o_ref.dtype)  # residual add, lane-dense store


def resblock_forward(x_nchw, w1_oihw, w2_oihw, *, mxu_dtype=None):
    """x_nchw: (B, C, H, W); w*: (C, C, 3, 3) PyTorch Conv2d weights (bias=False).

    mxu_dtype: dtype for MXU operands (e.g. jnp.bfloat16 on v6e/v7x); accumulation is
    always f32.  Defaults to the input dtype.
    """
    B, Cin, H, W = x_nchw.shape
    Cout = w1_oihw.shape[0]
    assert Cin == Cout, "residual add requires in_channels == out_channels"
    HW = H * W
    cdt = jnp.dtype(mxu_dtype) if mxu_dtype is not None else jnp.dtype(x_nchw.dtype)

    # NCHW with flattened spatial *is* the kernel layout: no transpose, no jnp.pad,
    # and only one copy of the input is streamed (the residual reuses the same block).
    x2d = x_nchw.reshape(B, Cin, HW)

    # (Cout, Cin, 3, 3) -> (3, 3, Cout, Cin) -> (9*Cout, Cin): row k*Cout + co, k = dy*3 + dx.
    w1k = jnp.transpose(w1_oihw, (2, 3, 0, 1)).reshape(9 * Cout, Cin).astype(cdt)
    w2k = jnp.transpose(w2_oihw, (2, 3, 0, 1)).reshape(9 * Cout, Cout).astype(cdt)

    masks = _tap_masks(H, W)                 # (9, HW) f32, fetched once (constant index_map)

    kernel = functools.partial(_resblock_kernel, H=H, W=W)

    out2d = pl.pallas_call(
        kernel,
        out_shape=jax.ShapeDtypeStruct((B, Cout, HW), x_nchw.dtype),
        grid_spec=pltpu.PrefetchScalarGridSpec(
            num_scalar_prefetch=0,
            grid=(B,),
            in_specs=[
                pl.BlockSpec((1, Cin, HW), lambda b: (b, 0, 0)),
                pl.BlockSpec((9 * Cout, Cin), lambda b: (0, 0)),
                pl.BlockSpec((9 * Cout, Cout), lambda b: (0, 0)),
                pl.BlockSpec((9, HW), lambda b: (0, 0)),
            ],
            out_specs=pl.BlockSpec((1, Cout, HW), lambda b: (b, 0, 0)),
        ),
        compiler_params=pltpu.CompilerParams(
            dimension_semantics=("parallel",),     # grid=(B,) feeds both v7x TensorCores
            vmem_limit_bytes=32 * 1024 * 1024,     # explicit cap; ~0.2 MB/step actually used
        ),
    )(x2d, w1k, w2k, masks)

    # (B, Cout, H*W) -> NCHW: a free reshape, no transpose needed.
    return out2d.reshape(B, Cout, H, W)


def _reference_forward(x_nchw, w1_oihw, w2_oihw):
    dn = ("NCHW", "OIHW", "NCHW")
    h = lax.conv_general_dilated(x_nchw, w1_oihw, (1, 1), "SAME", dimension_numbers=dn)
    h = jnp.maximum(h, 0.0)
    y = lax.conv_general_dilated(h, w2_oihw, (1, 1), "SAME", dimension_numbers=dn)
    return y + x_nchw


if __name__ == "__main__":
    key = jax.random.PRNGKey(0)
    kx, k1, k2 = jax.random.split(key, 3)

    B, C, H, W = 2, 4, 16, 16        # in_channels == out_channels == 4
    x = jax.random.normal(kx, (B, C, H, W), dtype=jnp.float32)
    w1 = 0.1 * jax.random.normal(k1, (C, C, 3, 3), dtype=jnp.float32)
    w2 = 0.1 * jax.random.normal(k2, (C, C, 3, 3), dtype=jnp.float32)

    ref = _reference_forward(x, w1, w2)

    # f32 MXU operands: exact check against the XLA conv reference.
    out = resblock_forward(x, w1, w2)
    jax.block_until_ready(out)
    assert out.shape == (B, C, H, W)
    assert jnp.allclose(out, ref, atol=1e-4, rtol=1e-4), "f32 kernel mismatch vs reference"

    # bf16 MXU operands (v6e/v7x fast path), f32 accumulation: looser tolerance.
    out_bf16 = resblock_forward(x, w1, w2, mxu_dtype=jnp.bfloat16)
    jax.block_until_ready(out_bf16)
    assert jnp.allclose(out_bf16, ref, atol=1e-1, rtol=1e-1), "bf16 kernel mismatch vs reference"

    print("KERNEL_OK")
</pallas_src>

<mosaic_0001>
module attributes {stable_mosaic.version = 11 : i64} {
  func.func @_resblock_kernel(%arg0: i32, %arg1: memref<1x4x256xf32, #tpu.memory_space<vmem>>, %arg2: memref<36x4xf32, #tpu.memory_space<vmem>>, %arg3: memref<36x4xf32, #tpu.memory_space<vmem>>, %arg4: memref<9x256xf32, #tpu.memory_space<vmem>>, %arg5: memref<1x4x256xf32, #tpu.memory_space<vmem>>) attributes {dimension_semantics = [#tpu.dimension_semantics<parallel>], iteration_bounds = array<i64: 2>, scalar_prefetch = 0 : i64, scratch_operands = 0 : i64, tpu.core_type = #tpu.core_type<tc>, window_params = [{transform_indices = @transform_0, window_bounds = array<i64: 1, 4, 256>}, {pipeline_mode = #tpu.pipeline_mode<synchronous>, transform_indices = @transform_1, window_bounds = array<i64: 36, 4>}, {pipeline_mode = #tpu.pipeline_mode<synchronous>, transform_indices = @transform_2, window_bounds = array<i64: 36, 4>}, {pipeline_mode = #tpu.pipeline_mode<synchronous>, transform_indices = @transform_3, window_bounds = array<i64: 9, 256>}, {transform_indices = @transform_4, window_bounds = array<i64: 1, 4, 256>}]} {
    %c0 = arith.constant 0 : index
    %c0_0 = arith.constant 0 : index
    %c0_1 = arith.constant 0 : index
    %0 = vector.load %arg1[%c0, %c0_0, %c0_1] : memref<1x4x256xf32, #tpu.memory_space<vmem>>, vector<1x4x256xf32>
    %1 = vector.shape_cast %0 : vector<1x4x256xf32> to vector<4x256xf32>
    %c0_2 = arith.constant 0 : index
    %c0_3 = arith.constant 0 : index
    %2 = vector.load %arg4[%c0_2, %c0_3] : memref<9x256xf32, #tpu.memory_space<vmem>>, vector<9x256xf32>
    %c0_4 = arith.constant 0 : index
    %c0_5 = arith.constant 0 : index
    %3 = vector.load %arg2[%c0_4, %c0_5] : memref<36x4xf32, #tpu.memory_space<vmem>>, vector<36x4xf32>
    %cst = arith.constant dense<0.000000e+00> : vector<36x256xf32>
    %4 = tpu.matmul %3, %1, %cst {dimension_numbers = #tpu.dot_dimension_numbers<[1], [0], [0], [1], [0, 0, 1, 1], [], []>} : vector<36x4xf32>, vector<4x256xf32>, vector<36x256xf32> -> vector<36x256xf32>
    %5 = vector.extract_strided_slice %4 {offsets = [16, 0], sizes = [4, 256], strides = [1, 1]} : vector<36x256xf32> to vector<4x256xf32>
    %6 = vector.extract_strided_slice %4 {offsets = [0, 0], sizes = [4, 256], strides = [1, 1]} : vector<36x256xf32> to vector<4x256xf32>
    %c17_i32 = arith.constant 17 : i32
    %7 = tpu.dynamic_rotate %6 by %c17_i32 dim 1 : vector<4x256xf32>, i32 -> vector<4x256xf32>
    %8 = vector.extract_strided_slice %2 {offsets = [0, 0], sizes = [1, 256], strides = [1, 1]} : vector<9x256xf32> to vector<1x256xf32>
    %9 = vector.broadcast %8 : vector<1x256xf32> to vector<4x256xf32>
    %10 = arith.mulf %7, %9 : vector<4x256xf32>
    %11 = arith.addf %5, %10 : vector<4x256xf32>
    %12 = vector.extract_strided_slice %4 {offsets = [4, 0], sizes = [4, 256], strides = [1, 1]} : vector<36x256xf32> to vector<4x256xf32>
    %c16_i32 = arith.constant 16 : i32
    %13 = tpu.dynamic_rotate %12 by %c16_i32 dim 1 : vector<4x256xf32>, i32 -> vector<4x256xf32>
    %14 = vector.extract_strided_slice %2 {offsets = [1, 0], sizes = [1, 256], strides = [1, 1]} : vector<9x256xf32> to vector<1x256xf32>
    %15 = vector.broadcast %14 : vector<1x256xf32> to vector<4x256xf32>
    %16 = arith.mulf %13, %15 : vector<4x256xf32>
    %17 = arith.addf %11, %16 : vector<4x256xf32>
    %18 = vector.extract_strided_slice %4 {offsets = [8, 0], sizes = [4, 256], strides = [1, 1]} : vector<36x256xf32> to vector<4x256xf32>
    %c15_i32 = arith.constant 15 : i32
    %19 = tpu.dynamic_rotate %18 by %c15_i32 dim 1 : vector<4x256xf32>, i32 -> vector<4x256xf32>
    %20 = vector.extract_strided_slice %2 {offsets = [2, 0], sizes = [1, 256], strides = [1, 1]} : vector<9x256xf32> to vector<1x256xf32>
    %21 = vector.broadcast %20 : vector<1x256xf32> to vector<4x256xf32>
    %22 = arith.mulf %19, %21 : vector<4x256xf32>
    %23 = arith.addf %17, %22 : vector<4x256xf32>
    %24 = vector.extract_strided_slice %4 {offsets = [12, 0], sizes = [4, 256], strides = [1, 1]} : vector<36x256xf32> to vector<4x256xf32>
    %c1_i32 = arith.constant 1 : i32
    %25 = tpu.dynamic_rotate %24 by %c1_i32 dim 1 : vector<4x256xf32>, i32 -> vector<4x256xf32>
    %26 = vector.extract_strided_slice %2 {offsets = [3, 0], sizes = [1, 256], strides = [1, 1]} : vector<9x256xf32> to vector<1x256xf32>
    %27 = vector.broadcast %26 : vector<1x256xf32> to vector<4x256xf32>
    %28 = arith.mulf %25, %27 : vector<4x256xf32>
    %29 = arith.addf %23, %28 : vector<4x256xf32>
    %30 = vector.extract_strided_slice %4 {offsets = [20, 0], sizes = [4, 256], strides = [1, 1]} : vector<36x256xf32> to vector<4x256xf32>
    %c255_i32 = arith.constant 255 : i32
    %31 = tpu.dynamic_rotate %30 by %c255_i32 dim 1 : vector<4x256xf32>, i32 -> vector<4x256xf32>
    %32 = vector.extract_strided_slice %2 {offsets = [5, 0], sizes = [1, 256], strides = [1, 1]} : vector<9x256xf32> to vector<1x256xf32>
    %33 = vector.broadcast %32 : vector<1x256xf32> to vector<4x256xf32>
    %34 = arith.mulf %31, %33 : vector<4x256xf32>
    %35 = arith.addf %29, %34 : vector<4x256xf32>
    %36 = vector.extract_strided_slice %4 {offsets = [24, 0], sizes = [4, 256], strides = [1, 1]} : vector<36x256xf32> to vector<4x256xf32>
    %c241_i32 = arith.constant 241 : i32
    %37 = tpu.dynamic_rotate %36 by %c241_i32 dim 1 : vector<4x256xf32>, i32 -> vector<4x256xf32>
    %38 = vector.extract_strided_slice %2 {offsets = [6, 0], sizes = [1, 256], strides = [1, 1]} : vector<9x256xf32> to vector<1x256xf32>
    %39 = vector.broadcast %38 : vector<1x256xf32> to vector<4x256xf32>
    %40 = arith.mulf %37, %39 : vector<4x256xf32>
    %41 = arith.addf %35, %40 : vector<4x256xf32>
    %42 = vector.extract_strided_slice %4 {offsets = [28, 0], sizes = [4, 256], strides = [1, 1]} : vector<36x256xf32> to vector<4x256xf32>
    %c240_i32 = arith.constant 240 : i32
    %43 = tpu.dynamic_rotate %42 by %c240_i32 dim 1 : vector<4x256xf32>, i32 -> vector<4x256xf32>
    %44 = vector.extract_strided_slice %2 {offsets = [7, 0], sizes = [1, 256], strides = [1, 1]} : vector<9x256xf32> to vector<1x256xf32>
    %45 = vector.broadcast %44 : vector<1x256xf32> to vector<4x256xf32>
    %46 = arith.mulf %43, %45 : vector<4x256xf32>
    %47 = arith.addf %41, %46 : vector<4x256xf32>
    %48 = vector.extract_strided_slice %4 {offsets = [32, 0], sizes = [4, 256], strides = [1, 1]} : vector<36x256xf32> to vector<4x256xf32>
    %c239_i32 = arith.constant 239 : i32
    %49 = tpu.dynamic_rotate %48 by %c239_i32 dim 1 : vector<4x256xf32>, i32 -> vector<4x256xf32>
    %50 = vector.extract_strided_slice %2 {offsets = [8, 0], sizes = [1, 256], strides = [1, 1]} : vector<9x256xf32> to vector<1x256xf32>
    %51 = vector.broadcast %50 : vector<1x256xf32> to vector<4x256xf32>
    %52 = arith.mulf %49, %51 : vector<4x256xf32>
    %53 = arith.addf %47, %52 : vector<4x256xf32>
    %cst_6 = arith.constant 0.000000e+00 : f32
    %54 = vector.broadcast %cst_6 : f32 to vector<4x256xf32>
    %55 = arith.maximumf %53, %54 : vector<4x256xf32>
    %c0_7 = arith.constant 0 : index
    %c0_8 = arith.constant 0 : index
    %56 = vector.load %arg3[%c0_7, %c0_8] : memref<36x4xf32, #tpu.memory_space<vmem>>, vector<36x4xf32>
    %cst_9 = arith.constant dense<0.000000e+00> : vector<36x256xf32>
    %57 = tpu.matmul %56, %55, %cst_9 {dimension_numbers = #tpu.dot_dimension_numbers<[1], [0], [0], [1], [0, 0, 1, 1], [], []>} : vector<36x4xf32>, vector<4x256xf32>, vector<36x256xf32> -> vector<36x256xf32>
    %58 = vector.extract_strided_slice %57 {offsets = [16, 0], sizes = [4, 256], strides = [1, 1]} : vector<36x256xf32> to vector<4x256xf32>
    %59 = vector.extract_strided_slice %57 {offsets = [0, 0], sizes = [4, 256], strides = [1, 1]} : vector<36x256xf32> to vector<4x256xf32>
    %c17_i32_10 = arith.constant 17 : i32
    %60 = tpu.dynamic_rotate %59 by %c17_i32_10 dim 1 : vector<4x256xf32>, i32 -> vector<4x256xf32>
    %61 = vector.extract_strided_slice %2 {offsets = [0, 0], sizes = [1, 256], strides = [1, 1]} : vector<9x256xf32> to vector<1x256xf32>
    %62 = vector.broadcast %61 : vector<1x256xf32> to vector<4x256xf32>
    %63 = arith.mulf %60, %62 : vector<4x256xf32>
    %64 = arith.addf %58, %63 : vector<4x256xf32>
    %65 = vector.extract_strided_slice %57 {offsets = [4, 0], sizes = [4, 256], strides = [1, 1]} : vector<36x256xf32> to vector<4x256xf32>
    %c16_i32_11 = arith.constant 16 : i32
    %66 = tpu.dynamic_rotate %65 by %c16_i32_11 dim 1 : vector<4x256xf32>, i32 -> vector<4x256xf32>
    %67 = vector.extract_strided_slice %2 {offsets = [1, 0], sizes = [1, 256], strides = [1, 1]} : vector<9x256xf32> to vector<1x256xf32>
    %68 = vector.broadcast %67 : vector<1x256xf32> to vector<4x256xf32>
    %69 = arith.mulf %66, %68 : vector<4x256xf32>
    %70 = arith.addf %64, %69 : vector<4x256xf32>
    %71 = vector.extract_strided_slice %57 {offsets = [8, 0], sizes = [4, 256], strides = [1, 1]} : vector<36x256xf32> to vector<4x256xf32>
    %c15_i32_12 = arith.constant 15 : i32
    %72 = tpu.dynamic_rotate %71 by %c15_i32_12 dim 1 : vector<4x256xf32>, i32 -> vector<4x256xf32>
    %73 = vector.extract_strided_slice %2 {offsets = [2, 0], sizes = [1, 256], strides = [1, 1]} : vector<9x256xf32> to vector<1x256xf32>
    %74 = vector.broadcast %73 : vector<1x256xf32> to vector<4x256xf32>
    %75 = arith.mulf %72, %74 : vector<4x256xf32>
    %76 = arith.addf %70, %75 : vector<4x256xf32>
    %77 = vector.extract_strided_slice %57 {offsets = [12, 0], sizes = [4, 256], strides = [1, 1]} : vector<36x256xf32> to vector<4x256xf32>
    %c1_i32_13 = arith.constant 1 : i32
    %78 = tpu.dynamic_rotate %77 by %c1_i32_13 dim 1 : vector<4x256xf32>, i32 -> vector<4x256xf32>
    %79 = vector.extract_strided_slice %2 {offsets = [3, 0], sizes = [1, 256], strides = [1, 1]} : vector<9x256xf32> to vector<1x256xf32>
    %80 = vector.broadcast %79 : vector<1x256xf32> to vector<4x256xf32>
    %81 = arith.mulf %78, %80 : vector<4x256xf32>
    %82 = arith.addf %76, %81 : vector<4x256xf32>
    %83 = vector.extract_strided_slice %57 {offsets = [20, 0], sizes = [4, 256], strides = [1, 1]} : vector<36x256xf32> to vector<4x256xf32>
    %c255_i32_14 = arith.constant 255 : i32
    %84 = tpu.dynamic_rotate %83 by %c255_i32_14 dim 1 : vector<4x256xf32>, i32 -> vector<4x256xf32>
    %85 = vector.extract_strided_slice %2 {offsets = [5, 0], sizes = [1, 256], strides = [1, 1]} : vector<9x256xf32> to vector<1x256xf32>
    %86 = vector.broadcast %85 : vector<1x256xf32> to vector<4x256xf32>
    %87 = arith.mulf %84, %86 : vector<4x256xf32>
    %88 = arith.addf %82, %87 : vector<4x256xf32>
    %89 = vector.extract_strided_slice %57 {offsets = [24, 0], sizes = [4, 256], strides = [1, 1]} : vector<36x256xf32> to vector<4x256xf32>
    %c241_i32_15 = arith.constant 241 : i32
    %90 = tpu.dynamic_rotate %89 by %c241_i32_15 dim 1 : vector<4x256xf32>, i32 -> vector<4x256xf32>
    %91 = vector.extract_strided_slice %2 {offsets = [6, 0], sizes = [1, 256], strides = [1, 1]} : vector<9x256xf32> to vector<1x256xf32>
    %92 = vector.broadcast %91 : vector<1x256xf32> to vector<4x256xf32>
    %93 = arith.mulf %90, %92 : vector<4x256xf32>
    %94 = arith.addf %88, %93 : vector<4x256xf32>
    %95 = vector.extract_strided_slice %57 {offsets = [28, 0], sizes = [4, 256], strides = [1, 1]} : vector<36x256xf32> to vector<4x256xf32>
    %c240_i32_16 = arith.constant 240 : i32
    %96 = tpu.dynamic_rotate %95 by %c240_i32_16 dim 1 : vector<4x256xf32>, i32 -> vector<4x256xf32>
    %97 = vector.extract_strided_slice %2 {offsets = [7, 0], sizes = [1, 256], strides = [1, 1]} : vector<9x256xf32> to vector<1x256xf32>
    %98 = vector.broadcast %97 : vector<1x256xf32> to vector<4x256xf32>
    %99 = arith.mulf %96, %98 : vector<4x256xf32>
    %100 = arith.addf %94, %99 : vector<4x256xf32>
    %101 = vector.extract_strided_slice %57 {offsets = [32, 0], sizes = [4, 256], strides = [1, 1]} : vector<36x256xf32> to vector<4x256xf32>
    %c239_i32_17 = arith.constant 239 : i32
    %102 = tpu.dynamic_rotate %101 by %c239_i32_17 dim 1 : vector<4x256xf32>, i32 -> vector<4x256xf32>
    %103 = vector.extract_strided_slice %2 {offsets = [8, 0], sizes = [1, 256], strides = [1, 1]} : vector<9x256xf32> to vector<1x256xf32>
    %104 = vector.broadcast %103 : vector<1x256xf32> to vector<4x256xf32>
    %105 = arith.mulf %102, %104 : vector<4x256xf32>
    %106 = arith.addf %100, %105 : vector<4x256xf32>
    %107 = arith.addf %106, %1 : vector<4x256xf32>
    %c0_18 = arith.constant 0 : index
    %c0_19 = arith.constant 0 : index
    %c0_20 = arith.constant 0 : index
    %108 = vector.load %arg5[%c0_18, %c0_19, %c0_20] : memref<1x4x256xf32, #tpu.memory_space<vmem>>, vector<1x4x256xf32>
    %109 = vector.shape_cast %108 : vector<1x4x256xf32> to vector<4x256xf32>
    %110 = vector.shape_cast %107 : vector<4x256xf32> to vector<1x4x256xf32>
    tpu.vector_store %arg5[%c0_18, %c0_19, %c0_20], %110 {strides = array<i32>} : memref<1x4x256xf32, #tpu.memory_space<vmem>>, vector<1x4x256xf32>,
    return
  }
  func.func @transform_0(%arg0: i32) -> (i32, i32, i32) {
    %c0_i32 = arith.constant 0 : i32
    %c0_i32_0 = arith.constant 0 : i32
    %c0_i32_1 = arith.constant 0 : i32
    return %arg0, %c0_i32, %c0_i32_0 : i32, i32, i32
  }
  func.func @transform_1(%arg0: i32) -> (i32, i32) {
    %c0_i32 = arith.constant 0 : i32
    %c0_i32_0 = arith.constant 0 : i32
    %c0_i32_1 = arith.constant 0 : i32
    return %c0_i32, %c0_i32_0 : i32, i32
  }
  func.func @transform_2(%arg0: i32) -> (i32, i32) {
    %c0_i32 = arith.constant 0 : i32
    %c0_i32_0 = arith.constant 0 : i32
    %c0_i32_1 = arith.constant 0 : i32
    return %c0_i32, %c0_i32_0 : i32, i32
  }
  func.func @transform_3(%arg0: i32) -> (i32, i32) {
    %c0_i32 = arith.constant 0 : i32
    %c0_i32_0 = arith.constant 0 : i32
    %c0_i32_1 = arith.constant 0 : i32
    return %c0_i32, %c0_i32_0 : i32, i32
  }
  func.func @transform_4(%arg0: i32) -> (i32, i32, i32) {
    %c0_i32 = arith.constant 0 : i32
    %c0_i32_0 = arith.constant 0 : i32
    %c0_i32_1 = arith.constant 0 : i32
    return %arg0, %c0_i32, %c0_i32_0 : i32, i32, i32
  }
}

</mosaic_0001>

<llo_original>
// kernel: tpu_custom_call.1
$region0: #{tpu_custom_call.1}
  #allocation0 [shape = 'u32[]', space=smem, size = 0x4, offset = 0x4, fixed_abs, tag = 'smem constant byte address 0x4 - core index']
  #allocation1 [shape = 'u32[144,128]{1,0:T(1,128)}', space=vmem, size = 0x12000, scoped, tag = 'internal scratch']
  %s0 = inlined_call_operand.vmem [shape: f32[2,4,256], index: 0, kind: input, shape index: {}]
  %s1 = inlined_call_operand.vmem [shape: f32[36,4], index: 1, kind: input, shape index: {}]
  %s2 = inlined_call_operand.vmem [shape: f32[36,4], index: 2, kind: input, shape index: {}]
  %s3 = inlined_call_operand.vmem [shape: f32[9,256], index: 3, kind: input, shape index: {}]
  %s4 = inlined_call_operand.hbm [shape: f32[2,4,256], index: 4, kind: output, shape index: {}]
  %s5 = sld [smem:[#allocation0]]
  $region49: #{tpu_custom_call.1} parent=0
    _
  %s7 = ssub.s32 1, %s5
  %s8 = scalar_select 0, %s7, %s5
  $region1: #{tpu_custom_call.1} parent=0
    #allocation2 [shape = 'u8[8192]{0}', space=vmem, size = 0x2000, scoped, tag = 'output window, operand 0']
    #allocation3 [shape = 's32[2]{0}', space=sflag, size = 0x8, scoped, tag = 'scoped memory for tpu_custom_call.1']
    %9 = vsyncpa [#allocation3], 0
    %s10 = scalar_lea.sflag [#allocation3], 1
    %11 = vsyncpa %s10, 0
    loop: start=0, step=1, limit=4
    $region2: #{tpu_custom_call.1} parent=1 // loop_pre_header
      _
    $region3: #{tpu_custom_call.1} parent=1 // loop_header
      %s13 = sphi 0, %s17
      %p14 = scmp.ge.s32.totalorder %s13, 4
      %s23 = sphi 0, %s25
      %s26 = sphi 0, %s23
      %s27 = sphi 0, %s26
      %s43 = sphi 0, %s27
      %s47 = sphi 0, %s47
      %s49 = sphi 0, %s47
      %s50 = sphi 0, %s49
      %s64 = sphi 0, %s50
      %s68 = sphi 0, %s68
      %s70 = sphi 0, %s68
      %s71 = sphi 0, %s70
      %s85 = sphi 0, %s71
      %s89 = sphi 0, %s89
      %s91 = sphi 0, %s89
      %s92 = sphi 0, %s91
      %s106 = sphi 0, %s92
      %s112 = sphi 0, %s114
      %s115 = sphi 0, %s112
      %s116 = sphi 0, %s115
      %s132 = sphi 0, %s116
    $region4: #{tpu_custom_call.1} parent=1 // loop_header_branch
      %16 = sbr.rel (%p14) target = $region8
    $region5: #{tpu_custom_call.1} parent=1 // loop_body
      %s18 = ssub.s32 %s13, 1
      %s19 = ssub.s32 %s13, 2
      %s20 = sadd.s32 %s13, 1
      %s21 = ssub.s32 %s13, %s20
      %p22 = scmp.eq.s32.totalorder %s21, 0
      %s24 = sadd.s32 %s23, 1
      %s25 = scalar_select %p22, %s23, %s24
      %p28 = pneg %p22
      %p29 = scmp.eq.s32.totalorder %s13, 1
      %p30 = por %p28, %p29
      %p31 = scmp.ne.s32.totalorder %s23, %s26
      %p32 = scmp.eq.s32.totalorder %s13, 0
      %p33 = por %p31, %p32
      %p34 = scmp.ne.s32.totalorder %s23, %s26
      %p35 = scmp.eq.s32.totalorder %s18, 1
      %p36 = por %p34, %p35
      %p37 = scmp.ne.s32.totalorder %s26, %s27
      %p38 = scmp.eq.s32.totalorder %s18, 0
      %p39 = por %p37, %p38
      %p40 = scmp.ne.s32.totalorder %s26, %s27
      %p41 = scmp.eq.s32.totalorder %s19, 1
      %p42 = por %p40, %p41
      %p44 = scmp.ne.s32.totalorder %s27, %s43
      %p45 = scmp.eq.s32.totalorder %s19, 0
      %p46 = por %p44, %p45
      %s48 = sadd.s32 %s47, 1
      %p51 = scmp.eq.s32.totalorder %s13, 1
      %p52 = scmp.ne.s32.totalorder %s47, %s49
      %p53 = scmp.eq.s32.totalorder %s13, 0
      %p54 = por %p52, %p53
      %p55 = scmp.ne.s32.totalorder %s47, %s49
      %p56 = scmp.eq.s32.totalorder %s18, 1
      %p57 = por %p55, %p56
      %p58 = scmp.ne.s32.totalorder %s49, %s50
      %p59 = scmp.eq.s32.totalorder %s18, 0
      %p60 = por %p58, %p59
      %p61 = scmp.ne.s32.totalorder %s49, %s50
      %p62 = scmp.eq.s32.totalorder %s19, 1
      %p63 = por %p61, %p62
      %p65 = scmp.ne.s32.totalorder %s50, %s64
      %p66 = scmp.eq.s32.totalorder %s19, 0
      %p67 = por %p65, %p66
      %s69 = sadd.s32 %s68, 1
      %p72 = scmp.eq.s32.totalorder %s13, 1
      %p73 = scmp.ne.s32.totalorder %s68, %s70
      %p74 = scmp.eq.s32.totalorder %s13, 0
      %p75 = por %p73, %p74
      %p76 = scmp.ne.s32.totalorder %s68, %s70
      %p77 = scmp.eq.s32.totalorder %s18, 1
      %p78 = por %p76, %p77
      %p79 = scmp.ne.s32.totalorder %s70, %s71
      %p80 = scmp.eq.s32.totalorder %s18, 0
      %p81 = por %p79, %p80
      %p82 = scmp.ne.s32.totalorder %s70, %s71
      %p83 = scmp.eq.s32.totalorder %s19, 1
      %p84 = por %p82, %p83
      %p86 = scmp.ne.s32.totalorder %s71, %s85
      %p87 = scmp.eq.s32.totalorder %s19, 0
      %p88 = por %p86, %p87
      %s90 = sadd.s32 %s89, 1
      %p93 = scmp.eq.s32.totalorder %s13, 1
      %p94 = scmp.ne.s32.totalorder %s89, %s91
      %p95 = scmp.eq.s32.totalorder %s13, 0
      %p96 = por %p94, %p95
      %p97 = scmp.ne.s32.totalorder %s89, %s91
      %p98 = scmp.eq.s32.totalorder %s18, 1
      %p99 = por %p97, %p98
      %p100 = scmp.ne.s32.totalorder %s91, %s92
      %p101 = scmp.eq.s32.totalorder %s18, 0
      %p102 = por %p100, %p101
      %p103 = scmp.ne.s32.totalorder %s91, %s92
      %p104 = scmp.eq.s32.totalorder %s19, 1
      %p105 = por %p103, %p104
      %p107 = scmp.ne.s32.totalorder %s92, %s106
      %p108 = scmp.eq.s32.totalorder %s19, 0
      %p109 = por %p107, %p108
      %s110 = ssub.s32 %s13, %s20
      %p111 = scmp.eq.s32.totalorder %s110, 0
      %s113 = sadd.s32 %s112, 1
      %s114 = scalar_select %p111, %s112, %s113
      %p117 = pneg %p111
      %p118 = scmp.eq.s32.totalorder %s13, 1
      %p119 = por %p117, %p118
      %p120 = scmp.ne.s32.totalorder %s112, %s115
      %p121 = scmp.eq.s32.totalorder %s13, 0
      %p122 = por %p120, %p121
      %p123 = scmp.ne.s32.totalorder %s112, %s115
      %p124 = scmp.eq.s32.totalorder %s18, 1
      %p125 = por %p123, %p124
      %p126 = scmp.ne.s32.totalorder %s115, %s116
      %p127 = scmp.eq.s32.totalorder %s18, 0
      %p128 = por %p126, %p127
      %p129 = scmp.ne.s32.totalorder %s115, %s116
      %p130 = scmp.eq.s32.totalorder %s19, 1
      %p131 = por %p129, %p130
      %p133 = scmp.ne.s32.totalorder %s116, %s132
      %p134 = scmp.eq.s32.totalorder %s19, 0
      %p135 = por %p133, %p134
      %p136 = scmp.le.s32.totalorder 1, %s13
      %p137 = scmp.lt.s32.totalorder %s13, 3
      %p138 = pnand %p136, %p137
      %p139 = pneg %p138
      // Predicated region
      $region9: #{tpu_custom_call.1} parent=5 // pred_check
        _
      $region10: #{tpu_custom_call.1} parent=5 // pred_check_branch
        %141 = sbr.rel (%p138) target = $region12
      $region11: #{tpu_custom_call.1} parent=5 // pred_region
        %s142 = ssub.s32 %s13, 1
        // Predicated region
        $region13: #{tpu_custom_call.1} parent=11 // pred_check
          %p143 = pneg %p60
        $region14: #{tpu_custom_call.1} parent=11 // pred_check_branch
          %145 = sbr.rel (%p143) target = $region16
        $region15: #{tpu_custom_call.1} parent=11 // pred_region
          _
        $region16: #{tpu_custom_call.1} parent=11 // pred_fallthru
          _
        // Predicated region
        $region17: #{tpu_custom_call.1} parent=11 // pred_check
          %p146 = pneg %p81
        $region18: #{tpu_custom_call.1} parent=11 // pred_check_branch
          %148 = sbr.rel (%p146) target = $region20
        $region19: #{tpu_custom_call.1} parent=11 // pred_region
          _
        $region20: #{tpu_custom_call.1} parent=11 // pred_fallthru
          _
        // Predicated region
        $region21: #{tpu_custom_call.1} parent=11 // pred_check
          %p149 = pneg %p102
        $region22: #{tpu_custom_call.1} parent=11 // pred_check_branch
          %151 = sbr.rel (%p149) target = $region24
        $region23: #{tpu_custom_call.1} parent=11 // pred_region
          _
        $region24: #{tpu_custom_call.1} parent=11 // pred_fallthru
          _
      $region12: #{tpu_custom_call.1} parent=5 // pred_fallthru
        _
      %p152 = scmp.lt.s32.totalorder %s13, 2
      // Predicated region
      $region25: #{tpu_custom_call.1} parent=5 // pred_check
        %p153 = pneg %p152
      $region26: #{tpu_custom_call.1} parent=5 // pred_check_branch
        %155 = sbr.rel (%p153) target = $region28
      $region27: #{tpu_custom_call.1} parent=5 // pred_region
        // Predicated region
        $region29: #{tpu_custom_call.1} parent=27 // pred_check
          %p156 = pneg %p33
        $region30: #{tpu_custom_call.1} parent=27 // pred_check_branch
          %158 = sbr.rel (%p156) target = $region32
        $region31: #{tpu_custom_call.1} parent=27 // pred_region
          %p159 = scmp.lt.s32.totalorder %s13, 1
          %s160 = scalar_select %p159, %s13, 1
          %s161 = smul.addr %s160, 2
          %s162 = smul.addr %s161, 4
          %s163 = scalar_lea.vmem %s0, %s162
        $region32: #{tpu_custom_call.1} parent=27 // pred_fallthru
          _
      $region28: #{tpu_custom_call.1} parent=5 // pred_fallthru
        _
      %p164 = scmp.le.s32.totalorder 1, %s13
      %p165 = scmp.lt.s32.totalorder %s13, 3
      %p166 = pnand %p164, %p165
      %p167 = pneg %p166
      // Predicated region
      $region33: #{tpu_custom_call.1} parent=5 // pred_check
        _
      $region34: #{tpu_custom_call.1} parent=5 // pred_check_branch
        %169 = sbr.rel (%p166) target = $region36
      $region35: #{tpu_custom_call.1} parent=5 // pred_region
        %s170 = ssub.s32 %s13, 1
        %p171 = scmp.lt.s32.totalorder %s18, 1
        %s172 = scalar_select %p171, %s18, 1
        %s173 = smul.addr %s172, 2
        %s174 = smul.addr %s173, 4
        %s175 = scalar_lea.vmem %s0, %s174
        %p176 = pneg %p39
        %p177 = pneg %p36
        %p178 = pneg %p60
        %p179 = pneg %p57
        %p180 = pneg %p81
        %p181 = pneg %p78
        %p182 = pneg %p102
        %p183 = pneg %p99
        %p184 = pneg %p128
        %p185 = pneg %p125
        %s186 = sand.u32 %s115, 1
        %s187 = scalar_lea.sflag [#allocation3], %s186
        %s188 = sand.u32 %s115, 1
        %s189 = smul.addr %s188, 8
        %s190 = scalar_lea.vmem [#allocation2], %s189
        %p191 = scmp.lt.s32.totalorder %s18, 1
        %s192 = scalar_select %p191, %s18, 1
        %s193 = smul.addr %s192, 2
        %s194 = smul.addr %s193, 4
        %s195 = scalar_lea.vmem %s0, %s194
        %v196 = vld [vmem:[%s195] sm:$0xff]
        %v197 = vld [vmem:[%s3] sm:$0xff]
        %v198 = vld [vmem:[%s3 + $0x8] sm:$0xff]
        %v199 = vld [vmem:[%s3 + $0x10] sm:$0x1]
        %v200 = vld [vmem:[%s3 + $0x18] sm:$0x1]
        %v201 = vld [vmem:[%s1] sm:$0xff]
        %v202 = vld [vmem:[%s1 + $0x8] sm:$0xff]
        %v203 = vld [vmem:[%s1 + $0x10] sm:$0xff]
        %v204 = vld [vmem:[%s1 + $0x18] sm:$0xff]
        %v205 = vld [vmem:[%s1 + $0x20] sm:$0xf]
        %v207 = vcombine.high %v196, %v196
        %vm208 = vcmask 31744
        %v210 = vsel %vm208, %v201, 0
        %v213 = vsel %vm208, %v202, 0
        %v216 = vsel %vm208, %v203, 0
        %v219 = vsel %vm208, %v204, 0
        %v222 = vsel %vm208, %v205, 0
        %vm224 = vcmask 1043456
        %v225 = vsel %vm224, %v196, 0
        %v227 = vsel %vm224, %v207, 0
        %229 = vmatprep.subr.mxu0 %v227
        %230 = vmatpush1.msra.mxu0 %v225
        %231 = vmatprep.subr.mxu0 0.0
        %232 = vmatpush1.msra.mxu0 0.0
        %233 = vmatprep.subr.mxu0 0.0
        %234 = vmatpush1.msra.mxu0 0.0
        %235 = vmatprep.subr.mxu0 0.0
        %236 = vmatpush1.msra.mxu0 0.0
        %237 = vmatprep.subr.mxu0 0.0
        %238 = vmatpush1.msra.mxu0 0.0
        %239 = vmatprep.subr.mxu0 0.0
        %240 = vmatpush1.msra.mxu0 0.0
        %241 = vmatprep.subr.mxu0 0.0
        %242 = vmatpush1.msra.mxu0 0.0
        %243 = vmatprep.subr.mxu0 0.0
        %244 = vmatpush1.msra.mxu0 0.0
        %245 = vmatprep.subr.mxu0 0.0
        %246 = vmatpush1.msra.mxu0 0.0
        %247 = vmatprep.subr.mxu0 0.0
        %248 = vmatpush1.msra.mxu0 0.0
        %249 = vmatprep.subr.mxu0 0.0
        %250 = vmatpush1.msra.mxu0 0.0
        %251 = vmatprep.subr.mxu0 0.0
        %252 = vmatpush1.msra.mxu0 0.0
        %253 = vmatprep.subr.mxu0 0.0
        %254 = vmatpush1.msra.mxu0 0.0
        %255 = vmatprep.subr.mxu0 0.0
        %256 = vmatpush1.msra.mxu0 0.0
        %257 = vmatprep.subr.mxu0 0.0
        %258 = vmatpush1.msra.mxu0 0.0
        %259 = vmatprep.subr.mxu0 0.0
        %260 = vmatpush1.msra.mxu0 0.0
        %261 = vmatprep.subr.mxu0 0.0
        %262 = vmatpush1.msra.mxu0 0.0
        %263 = vmatprep.subr.mxu0 0.0
        %264 = vmatpush1.msra.mxu0 0.0
        %265 = vmatprep.subr.mxu0 0.0
        %266 = vmatpush1.msra.mxu0 0.0
        %267 = vmatprep.subr.mxu0 0.0
        %268 = vmatpush1.msra.mxu0 0.0
        %269 = vmatprep.subr.mxu0 0.0
        %270 = vmatpush1.msra.mxu0 0.0
        %271 = vmatprep.subr.mxu0 0.0
        %272 = vmatpush1.msra.mxu0 0.0
        %273 = vmatprep.subr.mxu0 0.0
        %274 = vmatpush1.msra.mxu0 0.0
        %275 = vmatprep.subr.mxu0 0.0
        %276 = vmatpush1.msra.mxu0 0.0
        %277 = vmatprep.subr.mxu0 0.0
        %278 = vmatpush1.msra.mxu0 0.0
        %279 = vmatprep.subr.mxu0 0.0
        %280 = vmatpush1.msra.mxu0 0.0
        %281 = vmatprep.subr.mxu0 0.0
        %282 = vmatpush1.msra.mxu0 0.0
        %283 = vmatprep.subr.mxu0 0.0
        %284 = vmatpush1.msra.mxu0 0.0
        %285 = vmatprep.subr.mxu0 0.0
        %286 = vmatpush1.msra.mxu0 0.0
        %287 = vmatprep.subr.mxu0 0.0
        %288 = vmatpush1.msra.mxu0 0.0
        %289 = vmatprep.subr.mxu0 0.0
        %290 = vmatpush1.msra.mxu0 0.0
        %291 = vmatprep.subr.mxu0 0.0
        %292 = vmatpush1.msra.mxu0 0.0
        %293 = vmatprep.mubr.f32.mxu0 0.0
        %294 = vmatmul.mubr.f32.gmra.mrb[0].mxu0 %v210
        %v295 = vpop.f32.mrb[0].mxu0
        %v296 = vadd.f32 0.0, %v295
        %v297 = vpop.f32.mrb[0].mxu0
        %v298 = vadd.f32 0.0, %v297
        %299 = vmatprep.mubr.f32.mxu0 0.0
        %300 = vmatmul.mubr.f32.gmra.mrb[0].mxu0 %v213
        %v301 = vpop.f32.mrb[0].mxu0
        %v302 = vadd.f32 0.0, %v301
        %v303 = vpop.f32.mrb[0].mxu0
        %v304 = vadd.f32 0.0, %v303
        %305 = vmatprep.mubr.f32.mxu0 0.0
        %306 = vmatmul.mubr.f32.gmra.mrb[0].mxu0 %v216
        %v307 = vpop.f32.mrb[0].mxu0
        %v308 = vadd.f32 0.0, %v307
        %v309 = vpop.f32.mrb[0].mxu0
        %v310 = vadd.f32 0.0, %v309
        %311 = vmatprep.mubr.f32.mxu0 0.0
        %312 = vmatmul.mubr.f32.gmra.mrb[0].mxu0 %v219
        %v313 = vpop.f32.mrb[0].mxu0
        %v314 = vadd.f32 0.0, %v313
        %v315 = vpop.f32.mrb[0].mxu0
        %v316 = vadd.f32 0.0, %v315
        %317 = vmatprep.mubr.f32.mxu0 0.0
        %318 = vmatmul.mubr.f32.gmra.mrb[0].mxu0 %v222
        %v319 = vpop.f32.mrb[0].mxu0
        %v320 = vadd.f32 0.0, %v319
        %v321 = vpop.f32.mrb[0].mxu0
        %v322 = vadd.f32 0.0, %v321
        %323 = vdwg.mxu0
        %324 = vrot.lane.b32.xlu0 %v296, 17
        %v325 = vpop.permute.xlu0 %324
        %326 = vrot.lane.b32.xlu0 %v298, 17
        %v327 = vpop.permute.xlu0 %326
        %v328 = vlaneseq
        %v329 = vand.u32 %v328, 127
        %vm330 = vcmp.lt.s32.totalorder %v329, 17
        %v331 = vsel %vm330, %v325, %v327
        %v332 = vsel %vm330, %v327, %v325
        %v333 = vlaneseq
        %v334 = vshrl.u32 %v333, 7
        %v335 = vsub.s32 0, %v334
        %v336 = vrot.slane %v197, %v335
        %v337 = vlaneseq
        %v338 = vshrl.u32 %v337, 7
        %v339 = vsub.s32 0, %v338
        %v340 = vrot.slane %v198, %v339
        %v341 = vmul.f32 %v332, %v336
        %v342 = vmul.f32 %v331, %v340
        %v343 = vadd.f32 %v308, %v341
        %v344 = vadd.f32 %v310, %v342
        %v347 = vrot.slane %v296, 4
        %v348 = vrot.slane %v298, 4
        %351 = vrot.lane.b32.xlu0 %v347, 16
        %v352 = vpop.permute.xlu0 %351
        %353 = vrot.lane.b32.xlu0 %v348, 16
        %v354 = vpop.permute.xlu0 %353
        %vm355 = vcmp.lt.s32.totalorder %v329, 16
        %v356 = vsel %vm355, %v352, %v354
        %v357 = vsel %vm355, %v354, %v352
        %v358 = vlaneseq
        %v359 = vshrl.u32 %v358, 7
        %v360 = vsub.s32 1, %v359
        %v361 = vrot.slane %v197, %v360
        %v362 = vlaneseq
        %v363 = vshrl.u32 %v362, 7
        %v364 = vsub.s32 1, %v363
        %v365 = vrot.slane %v198, %v364
        %v366 = vmul.f32 %v357, %v361
        %v367 = vmul.f32 %v356, %v365
        %v368 = vadd.f32 %v343, %v366
        %v369 = vadd.f32 %v344, %v367
        %370 = vrot.lane.b32.xlu0 %v302, 15
        %v371 = vpop.permute.xlu0 %370
        %372 = vrot.lane.b32.xlu0 %v304, 15
        %v373 = vpop.permute.xlu0 %372
        %vm374 = vcmp.lt.s32.totalorder %v329, 15
        %v375 = vsel %vm374, %v371, %v373
        %v376 = vsel %vm374, %v373, %v371
        %v377 = vlaneseq
        %v378 = vshrl.u32 %v377, 7
        %v379 = vsub.s32 2, %v378
        %v380 = vrot.slane %v197, %v379
        %v381 = vlaneseq
        %v382 = vshrl.u32 %v381, 7
        %v383 = vsub.s32 2, %v382
        %v384 = vrot.slane %v198, %v383
        %v385 = vmul.f32 %v376, %v380
        %v386 = vmul.f32 %v375, %v384
        %v387 = vadd.f32 %v368, %v385
        %v388 = vadd.f32 %v369, %v386
        %v391 = vrot.slane %v302, 4
        %v392 = vrot.slane %v304, 4
        %395 = vrot.lane.b32.xlu0 %v391, 1
        %v396 = vpop.permute.xlu0 %395
        %397 = vrot.lane.b32.xlu0 %v392, 1
        %v398 = vpop.permute.xlu0 %397
        %vm399 = vcmp.lt.s32.totalorder %v329, 1
        %v400 = vsel %vm399, %v396, %v398
        %v401 = vsel %vm399, %v398, %v396
        %v402 = vlaneseq
        %v403 = vshrl.u32 %v402, 7
        %v404 = vsub.s32 3, %v403
        %v405 = vrot.slane %v197, %v404
        %v406 = vlaneseq
        %v407 = vshrl.u32 %v406, 7
        %v408 = vsub.s32 3, %v407
        %v409 = vrot.slane %v198, %v408
        %v410 = vmul.f32 %v401, %v405
        %v411 = vmul.f32 %v400, %v409
        %v412 = vadd.f32 %v387, %v410
        %v413 = vadd.f32 %v388, %v411
        %v416 = vrot.slane %v308, 4
        %v417 = vrot.slane %v310, 4
        %420 = vrot.lane.b32.xlu0 %v416, 127
        %v421 = vpop.permute.xlu0 %420
        %422 = vrot.lane.b32.xlu0 %v417, 127
        %v423 = vpop.permute.xlu0 %422
        %vm424 = vcmp.lt.s32.totalorder %v329, 127
        %v425 = vsel %vm424, %v421, %v423
        %v426 = vsel %vm424, %v423, %v421
        %v427 = vlaneseq
        %v428 = vshrl.u32 %v427, 7
        %v429 = vsub.s32 5, %v428
        %v430 = vrot.slane %v197, %v429
        %v431 = vlaneseq
        %v432 = vshrl.u32 %v431, 7
        %v433 = vsub.s32 5, %v432
        %v434 = vrot.slane %v198, %v433
        %v435 = vmul.f32 %v425, %v430
        %v436 = vmul.f32 %v426, %v434
        %v437 = vadd.f32 %v412, %v435
        %v438 = vadd.f32 %v413, %v436
        %439 = vrot.lane.b32.xlu0 %v314, 113
        %v440 = vpop.permute.xlu0 %439
        %441 = vrot.lane.b32.xlu0 %v316, 113
        %v442 = vpop.permute.xlu0 %441
        %vm443 = vcmp.lt.s32.totalorder %v329, 113
        %v444 = vsel %vm443, %v440, %v442
        %v445 = vsel %vm443, %v442, %v440
        %v446 = vlaneseq
        %v447 = vshrl.u32 %v446, 7
        %v448 = vsub.s32 6, %v447
        %v449 = vrot.slane %v197, %v448
        %v450 = vlaneseq
        %v451 = vshrl.u32 %v450, 7
        %v452 = vsub.s32 6, %v451
        %v453 = vrot.slane %v198, %v452
        %v454 = vmul.f32 %v444, %v449
        %v455 = vmul.f32 %v445, %v453
        %v456 = vadd.f32 %v437, %v454
        %v457 = vadd.f32 %v438, %v455
        %v460 = vrot.slane %v314, 4
        %v461 = vrot.slane %v316, 4
        %464 = vrot.lane.b32.xlu0 %v460, 112
        %v465 = vpop.permute.xlu0 %464
        %466 = vrot.lane.b32.xlu0 %v461, 112
        %v467 = vpop.permute.xlu0 %466
        %vm468 = vcmp.lt.s32.totalorder %v329, 112
        %v469 = vsel %vm468, %v465, %v467
        %v470 = vsel %vm468, %v467, %v465
        %v471 = vlaneseq
        %v472 = vshrl.u32 %v471, 7
        %v473 = vsub.s32 7, %v472
        %v474 = vrot.slane %v197, %v473
        %v475 = vlaneseq
        %v476 = vshrl.u32 %v475, 7
        %v477 = vsub.s32 7, %v476
        %v478 = vrot.slane %v198, %v477
        %v479 = vmul.f32 %v469, %v474
        %v480 = vmul.f32 %v470, %v478
        %v481 = vadd.f32 %v456, %v479
        %v482 = vadd.f32 %v457, %v480
        %483 = vrot.lane.b32.xlu0 %v320, 111
        %v484 = vpop.permute.xlu0 %483
        %485 = vrot.lane.b32.xlu0 %v322, 111
        %v486 = vpop.permute.xlu0 %485
        %vm487 = vcmp.lt.s32.totalorder %v329, 111
        %v488 = vsel %vm487, %v484, %v486
        %v489 = vsel %vm487, %v486, %v484
        %v490 = vlaneseq
        %v491 = vshrl.u32 %v490, 7
        %v492 = vsub.s32 0, %v491
        %v493 = vrot.slane %v199, %v492
        %v494 = vlaneseq
        %v495 = vshrl.u32 %v494, 7
        %v496 = vsub.s32 0, %v495
        %v497 = vrot.slane %v200, %v496
        %v498 = vmul.f32 %v488, %v493
        %v499 = vmul.f32 %v489, %v497
        %v500 = vadd.f32 %v481, %v498
        %v501 = vadd.f32 %v482, %v499
        %v502 = vmax.f32 %v500, 0.0
        %v503 = vmax.f32 %v501, 0.0
        %v504 = vld [vmem:[%s2] sm:$0xff]
        %v505 = vld [vmem:[%s2 + $0x8] sm:$0xff]
        %v506 = vld [vmem:[%s2 + $0x10] sm:$0xff]
        %v507 = vld [vmem:[%s2 + $0x18] sm:$0xff]
        %v508 = vld [vmem:[%s2 + $0x20] sm:$0xf]
        %v510 = vsel %vm208, %v504, 0
        %v513 = vsel %vm208, %v505, 0
        %v516 = vsel %vm208, %v506, 0
        %v519 = vsel %vm208, %v507, 0
        %v522 = vsel %vm208, %v508, 0
        %v525 = vsel %vm224, %v502, 0
        %v528 = vsel %vm224, %v503, 0
        %530 = vmatprep.subr.mxu0 %v528
        %531 = vmatpush1.msra.mxu0 %v525
        %532 = vmatprep.subr.mxu0 0.0
        %533 = vmatpush1.msra.mxu0 0.0
        %534 = vmatprep.subr.mxu0 0.0
        %535 = vmatpush1.msra.mxu0 0.0
        %536 = vmatprep.subr.mxu0 0.0
        %537 = vmatpush1.msra.mxu0 0.0
        %538 = vmatprep.subr.mxu0 0.0
        %539 = vmatpush1.msra.mxu0 0.0
        %540 = vmatprep.subr.mxu0 0.0
        %541 = vmatpush1.msra.mxu0 0.0
        %542 = vmatprep.subr.mxu0 0.0
        %543 = vmatpush1.msra.mxu0 0.0
        %544 = vmatprep.subr.mxu0 0.0
        %545 = vmatpush1.msra.mxu0 0.0
        %546 = vmatprep.subr.mxu0 0.0
        %547 = vmatpush1.msra.mxu0 0.0
        %548 = vmatprep.subr.mxu0 0.0
        %549 = vmatpush1.msra.mxu0 0.0
        %550 = vmatprep.subr.mxu0 0.0
        %551 = vmatpush1.msra.mxu0 0.0
        %552 = vmatprep.subr.mxu0 0.0
        %553 = vmatpush1.msra.mxu0 0.0
        %554 = vmatprep.subr.mxu0 0.0
        %555 = vmatpush1.msra.mxu0 0.0
        %556 = vmatprep.subr.mxu0 0.0
        %557 = vmatpush1.msra.mxu0 0.0
        %558 = vmatprep.subr.mxu0 0.0
        %559 = vmatpush1.msra.mxu0 0.0
        %560 = vmatprep.subr.mxu0 0.0
        %561 = vmatpush1.msra.mxu0 0.0
        %562 = vmatprep.subr.mxu0 0.0
        %563 = vmatpush1.msra.mxu0 0.0
        %564 = vmatprep.subr.mxu0 0.0
        %565 = vmatpush1.msra.mxu0 0.0
        %566 = vmatprep.subr.mxu0 0.0
        %567 = vmatpush1.msra.mxu0 0.0
        %568 = vmatprep.subr.mxu0 0.0
        %569 = vmatpush1.msra.mxu0 0.0
        %570 = vmatprep.subr.mxu0 0.0
        %571 = vmatpush1.msra.mxu0 0.0
        %572 = vmatprep.subr.mxu0 0.0
        %573 = vmatpush1.msra.mxu0 0.0
        %574 = vmatprep.subr.mxu0 0.0
        %575 = vmatpush1.msra.mxu0 0.0
        %576 = vmatprep.subr.mxu0 0.0
        %577 = vmatpush1.msra.mxu0 0.0
        %578 = vmatprep.subr.mxu0 0.0
        %579 = vmatpush1.msra.mxu0 0.0
        %580 = vmatprep.subr.mxu0 0.0
        %581 = vmatpush1.msra.mxu0 0.0
        %582 = vmatprep.subr.mxu0 0.0
        %583 = vmatpush1.msra.mxu0 0.0
        %584 = vmatprep.subr.mxu0 0.0
        %585 = vmatpush1.msra.mxu0 0.0
        %586 = vmatprep.subr.mxu0 0.0
        %587 = vmatpush1.msra.mxu0 0.0
        %588 = vmatprep.subr.mxu0 0.0
        %589 = vmatpush1.msra.mxu0 0.0
        %590 = vmatprep.subr.mxu0 0.0
        %591 = vmatpush1.msra.mxu0 0.0
        %592 = vmatprep.subr.mxu0 0.0
        %593 = vmatpush1.msra.mxu0 0.0
        %594 = vmatprep.mubr.f32.mxu0 0.0
        %595 = vmatmul.mubr.f32.gmra.mrb[0].mxu0 %v510
        %v596 = vpop.f32.mrb[0].mxu0
        %v597 = vadd.f32 0.0, %v596
        %v598 = vpop.f32.mrb[0].mxu0
        %v599 = vadd.f32 0.0, %v598
        %600 = vmatprep.mubr.f32.mxu0 0.0
        %601 = vmatmul.mubr.f32.gmra.mrb[0].mxu0 %v513
        %v602 = vpop.f32.mrb[0].mxu0
        %v603 = vadd.f32 0.0, %v602
        %v604 = vpop.f32.mrb[0].mxu0
        %v605 = vadd.f32 0.0, %v604
        %606 = vmatprep.mubr.f32.mxu0 0.0
        %607 = vmatmul.mubr.f32.gmra.mrb[0].mxu0 %v516
        %v608 = vpop.f32.mrb[0].mxu0
        %v609 = vadd.f32 0.0, %v608
        %v610 = vpop.f32.mrb[0].mxu0
        %v611 = vadd.f32 0.0, %v610
        %612 = vmatprep.mubr.f32.mxu0 0.0
        %613 = vmatmul.mubr.f32.gmra.mrb[0].mxu0 %v519
        %v614 = vpop.f32.mrb[0].mxu0
        %v615 = vadd.f32 0.0, %v614
        %v616 = vpop.f32.mrb[0].mxu0
        %v617 = vadd.f32 0.0, %v616
        %618 = vmatprep.mubr.f32.mxu0 0.0
        %619 = vmatmul.mubr.f32.gmra.mrb[0].mxu0 %v522
        %v620 = vpop.f32.mrb[0].mxu0
        %v621 = vadd.f32 0.0, %v620
        %v622 = vpop.f32.mrb[0].mxu0
        %v623 = vadd.f32 0.0, %v622
        %624 = vdwg.mxu0
        %625 = vrot.lane.b32.xlu0 %v597, 17
        %v626 = vpop.permute.xlu0 %625
        %627 = vrot.lane.b32.xlu0 %v599, 17
        %v628 = vpop.permute.xlu0 %627
        %v629 = vsel %vm330, %v626, %v628
        %v630 = vsel %vm330, %v628, %v626
        %v631 = vmul.f32 %v630, %v336
        %v632 = vmul.f32 %v629, %v340
        %v633 = vadd.f32 %v609, %v631
        %v634 = vadd.f32 %v611, %v632
        %v637 = vrot.slane %v597, 4
        %v638 = vrot.slane %v599, 4
        %641 = vrot.lane.b32.xlu0 %v637, 16
        %v642 = vpop.permute.xlu0 %641
        %643 = vrot.lane.b32.xlu0 %v638, 16
        %v644 = vpop.permute.xlu0 %643
        %v645 = vsel %vm355, %v642, %v644
        %v646 = vsel %vm355, %v644, %v642
        %v647 = vmul.f32 %v646, %v361
        %v648 = vmul.f32 %v645, %v365
        %v649 = vadd.f32 %v633, %v647
        %v650 = vadd.f32 %v634, %v648
        %651 = vrot.lane.b32.xlu0 %v603, 15
        %v652 = vpop.permute.xlu0 %651
        %653 = vrot.lane.b32.xlu0 %v605, 15
        %v654 = vpop.permute.xlu0 %653
        %v655 = vsel %vm374, %v652, %v654
        %v656 = vsel %vm374, %v654, %v652
        %v657 = vmul.f32 %v656, %v380
        %v658 = vmul.f32 %v655, %v384
        %v659 = vadd.f32 %v649, %v657
        %v660 = vadd.f32 %v650, %v658
        %v663 = vrot.slane %v603, 4
        %v664 = vrot.slane %v605, 4
        %667 = vrot.lane.b32.xlu0 %v663, 1
        %v668 = vpop.permute.xlu0 %667
        %669 = vrot.lane.b32.xlu0 %v664, 1
        %v670 = vpop.permute.xlu0 %669
        %v671 = vsel %vm399, %v668, %v670
        %v672 = vsel %vm399, %v670, %v668
        %v673 = vmul.f32 %v672, %v405
        %v674 = vmul.f32 %v671, %v409
        %v675 = vadd.f32 %v659, %v673
        %v676 = vadd.f32 %v660, %v674
        %v679 = vrot.slane %v609, 4
        %v680 = vrot.slane %v611, 4
        %683 = vrot.lane.b32.xlu0 %v679, 127
        %v684 = vpop.permute.xlu0 %683
        %685 = vrot.lane.b32.xlu0 %v680, 127
        %v686 = vpop.permute.xlu0 %685
        %v687 = vsel %vm424, %v684, %v686
        %v688 = vsel %vm424, %v686, %v684
        %v689 = vmul.f32 %v687, %v430
        %v690 = vmul.f32 %v688, %v434
        %v691 = vadd.f32 %v675, %v689
        %v692 = vadd.f32 %v676, %v690
        %693 = vrot.lane.b32.xlu0 %v615, 113
        %v694 = vpop.permute.xlu0 %693
        %695 = vrot.lane.b32.xlu0 %v617, 113
        %v696 = vpop.permute.xlu0 %695
        %v697 = vsel %vm443, %v694, %v696
        %v698 = vsel %vm443, %v696, %v694
        %v699 = vmul.f32 %v697, %v449
        %v700 = vmul.f32 %v698, %v453
        %v701 = vadd.f32 %v691, %v699
        %v702 = vadd.f32 %v692, %v700
        %v705 = vrot.slane %v615, 4
        %v706 = vrot.slane %v617, 4
        %709 = vrot.lane.b32.xlu0 %v705, 112
        %v710 = vpop.permute.xlu0 %709
        %711 = vrot.lane.b32.xlu0 %v706, 112
        %v712 = vpop.permute.xlu0 %711
        %v713 = vsel %vm468, %v710, %v712
        %v714 = vsel %vm468, %v712, %v710
        %v715 = vmul.f32 %v713, %v474
        %v716 = vmul.f32 %v714, %v478
        %v717 = vadd.f32 %v701, %v715
        %v718 = vadd.f32 %v702, %v716
        %719 = vrot.lane.b32.xlu0 %v621, 111
        %v720 = vpop.permute.xlu0 %719
        %721 = vrot.lane.b32.xlu0 %v623, 111
        %v722 = vpop.permute.xlu0 %721
        %v723 = vsel %vm487, %v720, %v722
        %v724 = vsel %vm487, %v722, %v720
        %v725 = vmul.f32 %v723, %v493
        %v726 = vmul.f32 %v724, %v497
        %v727 = vadd.f32 %v717, %v725
        %v728 = vadd.f32 %v718, %v726
        %v730 = vadd.f32 %v727, %v196
        %v731 = vadd.f32 %v728, %v207
        %v734 = vcombine.low %v730, %v731
        %736 = vst [vmem:[%s190] sm:$0xff] %v734
        %s737 = sand.u32 %s115, 1
        %s738 = scalar_lea.sflag [#allocation3], %s737
        %s739 = sand.u32 %s115, 1
        %s740 = smul.addr %s739, 8
        %s741 = scalar_lea.vmem [#allocation2], %s740
        // Predicated region
        $region37: #{tpu_custom_call.1} parent=35 // pred_check
          %p742 = pneg %p125
        $region38: #{tpu_custom_call.1} parent=35 // pred_check_branch
          %744 = sbr.rel (%p742) target = $region40
        $region39: #{tpu_custom_call.1} parent=35 // pred_region
          %s746 = ssub.s32 128, 128
          %747 = vsyncadd %s738, %s746
          %s748 = smul.addr %s18, 2
          %s749 = smul.addr %s748, 64
          %s750 = scalar_lea.hbm %s4, %s749
          %s752 = sshll.u32 %s741, 4
          %s753 = int_to_ptr.vmem [resolvable:$true] %s752
          %755 = dma.vmem_to_hbm [thread:$0]  %s753, 128, %s750, %s738
        $region40: #{tpu_custom_call.1} parent=35 // pred_fallthru
          _
      $region36: #{tpu_custom_call.1} parent=5 // pred_fallthru
        _
      %p756 = scmp.le.s32.totalorder 2, %s13
      // Predicated region
      $region41: #{tpu_custom_call.1} parent=5 // pred_check
        %p757 = pneg %p756
      $region42: #{tpu_custom_call.1} parent=5 // pred_check_branch
        %759 = sbr.rel (%p757) target = $region44
      $region43: #{tpu_custom_call.1} parent=5 // pred_region
        %s760 = ssub.s32 %s13, 2
        // Predicated region
        $region45: #{tpu_custom_call.1} parent=43 // pred_check
          %p761 = pneg %p131
        $region46: #{tpu_custom_call.1} parent=43 // pred_check_branch
          %763 = sbr.rel (%p761) target = $region48
        $region47: #{tpu_custom_call.1} parent=43 // pred_region
          %s764 = sand.u32 %s116, 1
          %s765 = scalar_lea.sflag [#allocation3], %s764
          %s766 = sand.u32 %s116, 1
          %s767 = smul.addr %s766, 8
          %s768 = scalar_lea.vmem [#allocation2], %s767
          %769 = dma.done %s765, 128
        $region48: #{tpu_custom_call.1} parent=43 // pred_fallthru
          _
      $region44: #{tpu_custom_call.1} parent=5 // pred_fallthru
        _
    $region6: #{tpu_custom_call.1} parent=1 // loop_footer
      %s17 = sadd.s32 1, %s13
    $region7: #{tpu_custom_call.1} parent=1 // loop_footer_branch
      %12 = sbr.rel target = $region3
    $region8: #{tpu_custom_call.1} parent=1 // loop_exit
      _
    %770 = vsyncpa [#allocation3], 1
    %s771 = scalar_lea.sflag [#allocation3], 1
    %772 = vsyncpa %s771, 1

</llo_original>
